<compile_context>
chip_gen: v7x
topology: tpu7x:2x2x1
jax: 0.10.0
libtpu: 0.0.40
codegen_flags: <defaults>
</compile_context>

<pallas_src>
import functools

import jax
import jax.numpy as jnp
from jax.experimental import pallas as pl
from jax.experimental.pallas import tpu as pltpu

LANE = 128
SUBLANE = 8

# TODO(synk): LAMBackbone (frozen pretrained checkpoint video model) is not
# replicated; its (B, T, 256) middle-feature output is taken as kernel input.


def _round_up(x, m):
    return ((x + m - 1) // m) * m


def _pick_batch_tile(b):
    if b <= 8:
        return b
    for cand in (16, 8):
        if b % cand == 0:
            return cand
    return b  # fallback: whole batch in one tile (block == full dim is legal)


def _pick_temporal_tile(t, tb, d, itemsize, budget_bytes=8 << 20):
    """Largest tile that (a) divides T, (b) is sublane-aligned, (c) fits budget."""
    if t * tb * d * itemsize <= budget_bytes:
        return t  # whole temporal axis in one tile
    max_tt = max(SUBLANE, budget_bytes // max(1, tb * d * itemsize))
    for cand in range(min(max_tt, t), SUBLANE - 1, -1):
        if t % cand == 0 and cand % SUBLANE == 0:
            return cand
    return t  # fallback: whole temporal axis (block == full dim is legal)


def lam2ttm_kernel(inv_t, feat_ref, w1_ref, b1_ref, w2_ref, b2_ref, w3_ref,
                   b3_ref, out_ref, acc_ref):
    """Grid = (batch tiles [parallel], temporal tiles [arbitrary reduction])."""
    k = pl.program_id(1)

    @pl.when(k == 0)
    def _init():
        acc_ref[...] = jnp.zeros_like(acc_ref)

    # Partial temporal sum for this tile (accumulate in f32).  Sublane (axis=1)
    # reduction -> XLU; leaves VALU/MXU slots free.
    acc_ref[...] += jnp.sum(feat_ref[...].astype(jnp.float32), axis=1)

    @pl.when(k == pl.num_programs(1) - 1)
    def _finalize():
        pooled = acc_ref[...] * inv_t                          # (TB, 256) mean
        # fc1 + ReLU   (256 -> 128-padded hidden)
        h1 = jnp.maximum(
            jnp.dot(pooled, w1_ref[...],
                    preferred_element_type=jnp.float32) + b1_ref[...], 0.0)
        # fc2 + ReLU   (padded hidden -> padded hidden2)
        h2 = jnp.maximum(
            jnp.dot(h1, w2_ref[...],
                    preferred_element_type=jnp.float32) + b2_ref[...], 0.0)
        # fc3          (padded hidden2 -> 128-padded logits, lane-dense store)
        logits = jnp.dot(h2, w3_ref[...],
                         preferred_element_type=jnp.float32) + b3_ref[...]
        out_ref[...] = logits.astype(out_ref.dtype)


def lam2ttm_forward(lam_feats, params):
    """lam_feats: (B, T, 256). params: dict of (in,out) weights, (1,out) biases."""
    B, T, D = lam_feats.shape
    w1, b1 = params["w1"], params["b1"]
    w2, b2 = params["w2"], params["b2"]
    w3, b3 = params["w3"], params["b3"]

    h1 = w1.shape[1]
    h2 = w2.shape[1]
    nc = w3.shape[1]
    h1p = _round_up(h1, LANE)
    h2p = _round_up(h2, LANE)
    ncp = _round_up(nc, LANE)

    # Zero-pad weights / biases to lane-dense (128-multiple) widths.  Padded
    # columns/rows are zero, so padded hidden units are exactly 0 after ReLU
    # and contribute nothing; padded logit columns are sliced off below.
    # (In a real deployment do this padding once at parameter-load time.)
    w1p = jnp.pad(w1, ((0, 0), (0, h1p - h1)))
    b1p = jnp.pad(b1, ((0, 0), (0, h1p - h1)))
    w2p = jnp.pad(w2, ((0, h1p - h1), (0, h2p - h2)))
    b2p = jnp.pad(b2, ((0, 0), (0, h2p - h2)))
    w3p = jnp.pad(w3, ((0, h2p - h2), (0, ncp - nc)))
    b3p = jnp.pad(b3, ((0, 0), (0, ncp - nc)))

    itemsize = jnp.dtype(lam_feats.dtype).itemsize
    tb = _pick_batch_tile(B)
    tt = _pick_temporal_tile(T, tb, D, itemsize)
    grid = (B // tb, T // tt)

    feat_tile_bytes = tb * tt * D * itemsize
    weight_bytes = 4 * (w1p.size + b1p.size + w2p.size + b2p.size
                        + w3p.size + b3p.size)
    out_tile_bytes = 4 * tb * ncp
    scratch_bytes = 4 * tb * D
    vmem_bytes = (2 * feat_tile_bytes + weight_bytes + 2 * out_tile_bytes
                  + scratch_bytes + (2 << 20))
    vmem_bytes = int(min(max(vmem_bytes, 16 << 20), 48 << 20))

    cost = pl.CostEstimate(
        flops=2 * B * T * D + 2 * B * (D * h1p + h1p * h2p + h2p * ncp),
        transcendentals=0,
        bytes_accessed=lam_feats.size * itemsize + weight_bytes + 4 * B * ncp,
    )

    out_padded = pl.pallas_call(
        functools.partial(lam2ttm_kernel, 1.0 / T),
        out_shape=jax.ShapeDtypeStruct((B, ncp), jnp.float32),
        grid_spec=pltpu.PrefetchScalarGridSpec(
            num_scalar_prefetch=0,
            grid=grid,
            in_specs=[
                pl.BlockSpec((tb, tt, D), lambda i, k: (i, k, 0)),   # features
                pl.BlockSpec((D, h1p), lambda i, k: (0, 0)),         # w1
                pl.BlockSpec((1, h1p), lambda i, k: (0, 0)),         # b1
                pl.BlockSpec((h1p, h2p), lambda i, k: (0, 0)),       # w2
                pl.BlockSpec((1, h2p), lambda i, k: (0, 0)),         # b2
                pl.BlockSpec((h2p, ncp), lambda i, k: (0, 0)),       # w3
                pl.BlockSpec((1, ncp), lambda i, k: (0, 0)),         # b3
            ],
            out_specs=pl.BlockSpec((tb, ncp), lambda i, k: (i, 0)),
            scratch_shapes=[pltpu.VMEM((tb, D), jnp.float32)],
        ),
        compiler_params=pltpu.CompilerParams(
            dimension_semantics=("parallel", "arbitrary"),
            vmem_limit_bytes=vmem_bytes,
        ),
        cost_estimate=cost,
    )(lam_feats, w1p, b1p, w2p, b2p, w3p, b3p)

    return out_padded[:, :nc]


def init_params(key, in_dim=256, hidden_dim=32, hidden_dim2=32, num_classes=2):
    """Deterministic init mimicking nn.Linear's uniform(-1/sqrt(in), 1/sqrt(in))."""
    def linear(k, fan_in, fan_out):
        kw, kb = jax.random.split(k)
        bound = 1.0 / jnp.sqrt(fan_in)
        w = jax.random.uniform(kw, (fan_in, fan_out), jnp.float32, -bound, bound)
        b = jax.random.uniform(kb, (1, fan_out), jnp.float32, -bound, bound)
        return w, b

    k1, k2, k3 = jax.random.split(key, 3)
    w1, b1 = linear(k1, in_dim, hidden_dim)
    w2, b2 = linear(k2, hidden_dim, hidden_dim2)
    w3, b3 = linear(k3, hidden_dim2, num_classes)
    return {"w1": w1, "b1": b1, "w2": w2, "b2": b2, "w3": w3, "b3": b3}


def reference_forward(lam_feats, params):
    pooled = jnp.mean(lam_feats, axis=1)
    h1 = jnp.maximum(pooled @ params["w1"] + params["b1"], 0.0)
    h2 = jnp.maximum(h1 @ params["w2"] + params["b2"], 0.0)
    return h2 @ params["w3"] + params["b3"]


if __name__ == "__main__":
    key = jax.random.PRNGKey(0)
    k_feat, k_param = jax.random.split(key)

    B, T, D = 2, 8, 256            # batch, temporal frames, LAM feature dim
    hidden_dim, hidden_dim2 = 32, 32

    lam_feats = jax.random.normal(k_feat, (B, T, D), dtype=jnp.float32)
    params = init_params(k_param, D, hidden_dim, hidden_dim2, 2)

    out = lam2ttm_forward(lam_feats, params)
    out = jax.block_until_ready(out)

    ref = reference_forward(lam_feats, params)
    assert out.shape == (B, 2)
    assert jnp.allclose(out, ref, atol=1e-4, rtol=1e-4), "mismatch vs reference"

    print("KERNEL_OK")
</pallas_src>

<mosaic_0001>
module attributes {stable_mosaic.version = 11 : i64} {
  func.func @lam2ttm_kernel(%arg0: i32, %arg1: i32, %arg2: memref<2x8x256xf32, #tpu.memory_space<vmem>>, %arg3: memref<256x128xf32, #tpu.memory_space<vmem>>, %arg4: memref<1x128xf32, #tpu.memory_space<vmem>>, %arg5: memref<128x128xf32, #tpu.memory_space<vmem>>, %arg6: memref<1x128xf32, #tpu.memory_space<vmem>>, %arg7: memref<128x128xf32, #tpu.memory_space<vmem>>, %arg8: memref<1x128xf32, #tpu.memory_space<vmem>>, %arg9: memref<2x128xf32, #tpu.memory_space<vmem>>, %arg10: memref<2x256xf32, #tpu.memory_space<vmem>>) attributes {dimension_semantics = [#tpu.dimension_semantics<parallel>, #tpu.dimension_semantics<arbitrary>], iteration_bounds = array<i64: 1, 1>, scalar_prefetch = 0 : i64, scratch_operands = 1 : i64, tpu.core_type = #tpu.core_type<tc>, window_params = [{transform_indices = @transform_0, window_bounds = array<i64: 2, 8, 256>}, {pipeline_mode = #tpu.pipeline_mode<synchronous>, transform_indices = @transform_1, window_bounds = array<i64: 256, 128>}, {pipeline_mode = #tpu.pipeline_mode<synchronous>, transform_indices = @transform_2, window_bounds = array<i64: 1, 128>}, {pipeline_mode = #tpu.pipeline_mode<synchronous>, transform_indices = @transform_3, window_bounds = array<i64: 128, 128>}, {pipeline_mode = #tpu.pipeline_mode<synchronous>, transform_indices = @transform_4, window_bounds = array<i64: 1, 128>}, {pipeline_mode = #tpu.pipeline_mode<synchronous>, transform_indices = @transform_5, window_bounds = array<i64: 128, 128>}, {pipeline_mode = #tpu.pipeline_mode<synchronous>, transform_indices = @transform_6, window_bounds = array<i64: 1, 128>}, {transform_indices = @transform_7, window_bounds = array<i64: 2, 128>}]} {
    %c0_i32 = arith.constant 0 : i32
    %0 = arith.cmpi eq, %arg1, %c0_i32 : i32
    %1 = arith.extui %0 : i1 to i32
    %c0_i32_0 = arith.constant 0 : i32
    %2 = arith.cmpi ne, %1, %c0_i32_0 : i32
    scf.if %2 {
      %cst_9 = arith.constant 0.000000e+00 : f32
      %11 = vector.broadcast %cst_9 : f32 to vector<2x256xf32>
      %c0_10 = arith.constant 0 : index
      %c0_11 = arith.constant 0 : index
      %12 = vector.load %arg10[%c0_10, %c0_11] : memref<2x256xf32, #tpu.memory_space<vmem>>, vector<2x256xf32>
      tpu.vector_store %arg10[%c0_10, %c0_11], %11 {strides = array<i32>} : memref<2x256xf32, #tpu.memory_space<vmem>>, vector<2x256xf32>,
    } else {
    }
    %c0 = arith.constant 0 : index
    %c0_1 = arith.constant 0 : index
    %3 = vector.load %arg10[%c0, %c0_1] : memref<2x256xf32, #tpu.memory_space<vmem>>, vector<2x256xf32>
    %c0_2 = arith.constant 0 : index
    %c0_3 = arith.constant 0 : index
    %c0_4 = arith.constant 0 : index
    %4 = vector.load %arg2[%c0_2, %c0_3, %c0_4] : memref<2x8x256xf32, #tpu.memory_space<vmem>>, vector<2x8x256xf32>
    %cst = arith.constant dense<0.000000e+00> : vector<2x256xf32>
    %5 = vector.multi_reduction <add>, %4, %cst [1] : vector<2x8x256xf32> to vector<2x256xf32>
    %6 = arith.addf %3, %5 : vector<2x256xf32>
    %c0_5 = arith.constant 0 : index
    %c0_6 = arith.constant 0 : index
    %7 = vector.load %arg10[%c0_5, %c0_6] : memref<2x256xf32, #tpu.memory_space<vmem>>, vector<2x256xf32>
    tpu.vector_store %arg10[%c0_5, %c0_6], %6 {strides = array<i32>} : memref<2x256xf32, #tpu.memory_space<vmem>>, vector<2x256xf32>,
    %c0_i32_7 = arith.constant 0 : i32
    %8 = arith.cmpi eq, %arg1, %c0_i32_7 : i32
    %9 = arith.extui %8 : i1 to i32
    %c0_i32_8 = arith.constant 0 : i32
    %10 = arith.cmpi ne, %9, %c0_i32_8 : i32
    scf.if %10 {
      %c0_9 = arith.constant 0 : index
      %c0_10 = arith.constant 0 : index
      %11 = vector.load %arg10[%c0_9, %c0_10] : memref<2x256xf32, #tpu.memory_space<vmem>>, vector<2x256xf32>
      %cst_11 = arith.constant 1.250000e-01 : f32
      %12 = vector.broadcast %cst_11 : f32 to vector<2x256xf32>
      %13 = arith.mulf %11, %12 : vector<2x256xf32>
      %c0_12 = arith.constant 0 : index
      %c0_13 = arith.constant 0 : index
      %14 = vector.load %arg3[%c0_12, %c0_13] : memref<256x128xf32, #tpu.memory_space<vmem>>, vector<256x128xf32>
      %cst_14 = arith.constant dense<0.000000e+00> : vector<2x128xf32>
      %15 = tpu.matmul %13, %14, %cst_14 {dimension_numbers = #tpu.dot_dimension_numbers<[1], [0], [0], [1], [0, 0, 1, 1], [], []>} : vector<2x256xf32>, vector<256x128xf32>, vector<2x128xf32> -> vector<2x128xf32>
      %c0_15 = arith.constant 0 : index
      %c0_16 = arith.constant 0 : index
      %16 = vector.load %arg4[%c0_15, %c0_16] : memref<1x128xf32, #tpu.memory_space<vmem>>, vector<1x128xf32>
      %17 = vector.broadcast %16 : vector<1x128xf32> to vector<2x128xf32>
      %18 = arith.addf %15, %17 : vector<2x128xf32>
      %cst_17 = arith.constant 0.000000e+00 : f32
      %19 = vector.broadcast %cst_17 : f32 to vector<2x128xf32>
      %20 = arith.maximumf %18, %19 : vector<2x128xf32>
      %c0_18 = arith.constant 0 : index
      %c0_19 = arith.constant 0 : index
      %21 = vector.load %arg5[%c0_18, %c0_19] : memref<128x128xf32, #tpu.memory_space<vmem>>, vector<128x128xf32>
      %cst_20 = arith.constant dense<0.000000e+00> : vector<2x128xf32>
      %22 = tpu.matmul %20, %21, %cst_20 {dimension_numbers = #tpu.dot_dimension_numbers<[1], [0], [0], [1], [0, 0, 1, 1], [], []>} : vector<2x128xf32>, vector<128x128xf32>, vector<2x128xf32> -> vector<2x128xf32>
      %c0_21 = arith.constant 0 : index
      %c0_22 = arith.constant 0 : index
      %23 = vector.load %arg6[%c0_21, %c0_22] : memref<1x128xf32, #tpu.memory_space<vmem>>, vector<1x128xf32>
      %24 = vector.broadcast %23 : vector<1x128xf32> to vector<2x128xf32>
      %25 = arith.addf %22, %24 : vector<2x128xf32>
      %cst_23 = arith.constant 0.000000e+00 : f32
      %26 = vector.broadcast %cst_23 : f32 to vector<2x128xf32>
      %27 = arith.maximumf %25, %26 : vector<2x128xf32>
      %c0_24 = arith.constant 0 : index
      %c0_25 = arith.constant 0 : index
      %28 = vector.load %arg7[%c0_24, %c0_25] : memref<128x128xf32, #tpu.memory_space<vmem>>, vector<128x128xf32>
      %cst_26 = arith.constant dense<0.000000e+00> : vector<2x128xf32>
      %29 = tpu.matmul %27, %28, %cst_26 {dimension_numbers = #tpu.dot_dimension_numbers<[1], [0], [0], [1], [0, 0, 1, 1], [], []>} : vector<2x128xf32>, vector<128x128xf32>, vector<2x128xf32> -> vector<2x128xf32>
      %c0_27 = arith.constant 0 : index
      %c0_28 = arith.constant 0 : index
      %30 = vector.load %arg8[%c0_27, %c0_28] : memref<1x128xf32, #tpu.memory_space<vmem>>, vector<1x128xf32>
      %31 = vector.broadcast %30 : vector<1x128xf32> to vector<2x128xf32>
      %32 = arith.addf %29, %31 : vector<2x128xf32>
      %c0_29 = arith.constant 0 : index
      %c0_30 = arith.constant 0 : index
      %33 = vector.load %arg9[%c0_29, %c0_30] : memref<2x128xf32, #tpu.memory_space<vmem>>, vector<2x128xf32>
      tpu.vector_store %arg9[%c0_29, %c0_30], %32 {strides = array<i32>} : memref<2x128xf32, #tpu.memory_space<vmem>>, vector<2x128xf32>,
    } else {
    }
    return
  }
  func.func @transform_0(%arg0: i32, %arg1: i32) -> (i32, i32, i32) {
    %c0_i32 = arith.constant 0 : i32
    %c0_i32_0 = arith.constant 0 : i32
    return %arg0, %arg1, %c0_i32 : i32, i32, i32
  }
  func.func @transform_1(%arg0: i32, %arg1: i32) -> (i32, i32) {
    %c0_i32 = arith.constant 0 : i32
    %c0_i32_0 = arith.constant 0 : i32
    %c0_i32_1 = arith.constant 0 : i32
    return %c0_i32, %c0_i32_0 : i32, i32
  }
  func.func @transform_2(%arg0: i32, %arg1: i32) -> (i32, i32) {
    %c0_i32 = arith.constant 0 : i32
    %c0_i32_0 = arith.constant 0 : i32
    %c0_i32_1 = arith.constant 0 : i32
    return %c0_i32, %c0_i32_0 : i32, i32
  }
  func.func @transform_3(%arg0: i32, %arg1: i32) -> (i32, i32) {
    %c0_i32 = arith.constant 0 : i32
    %c0_i32_0 = arith.constant 0 : i32
    %c0_i32_1 = arith.constant 0 : i32
    return %c0_i32, %c0_i32_0 : i32, i32
  }
  func.func @transform_4(%arg0: i32, %arg1: i32) -> (i32, i32) {
    %c0_i32 = arith.constant 0 : i32
    %c0_i32_0 = arith.constant 0 : i32
    %c0_i32_1 = arith.constant 0 : i32
    return %c0_i32, %c0_i32_0 : i32, i32
  }
  func.func @transform_5(%arg0: i32, %arg1: i32) -> (i32, i32) {
    %c0_i32 = arith.constant 0 : i32
    %c0_i32_0 = arith.constant 0 : i32
    %c0_i32_1 = arith.constant 0 : i32
    return %c0_i32, %c0_i32_0 : i32, i32
  }
  func.func @transform_6(%arg0: i32, %arg1: i32) -> (i32, i32) {
    %c0_i32 = arith.constant 0 : i32
    %c0_i32_0 = arith.constant 0 : i32
    %c0_i32_1 = arith.constant 0 : i32
    return %c0_i32, %c0_i32_0 : i32, i32
  }
  func.func @transform_7(%arg0: i32, %arg1: i32) -> (i32, i32) {
    %c0_i32 = arith.constant 0 : i32
    %c0_i32_0 = arith.constant 0 : i32
    return %arg0, %c0_i32 : i32, i32
  }
}

</mosaic_0001>

<llo_original>
// kernel: tpu_custom_call.1
$region0: #{tpu_custom_call.1}
  #allocation0 [shape = 'u32[]', space=smem, size = 0x4, offset = 0x4, fixed_abs, tag = 'smem constant byte address 0x4 - core index']
  #allocation1 [shape = 'u32[144,128]{1,0:T(1,128)}', space=vmem, size = 0x12000, scoped, tag = 'internal scratch']
  #allocation2 [shape = 'f32[2,256]{1,0:T(2,128)}', space=vmem, size = 0x800, scoped, tag = 'scratch operand']
  %s0 = inlined_call_operand.hbm [shape: f32[2,8,256], index: 0, kind: input, shape index: {}]
  %s1 = inlined_call_operand.hbm [shape: f32[256,128], index: 1, kind: input, shape index: {}]
  %s2 = inlined_call_operand.vmem [shape: f32[1,128], index: 2, kind: input, shape index: {}]
  %s3 = inlined_call_operand.hbm [shape: f32[128,128], index: 3, kind: input, shape index: {}]
  %s4 = inlined_call_operand.vmem [shape: f32[1,128], index: 4, kind: input, shape index: {}]
  %s5 = inlined_call_operand.hbm [shape: f32[128,128], index: 5, kind: input, shape index: {}]
  %s6 = inlined_call_operand.vmem [shape: f32[1,128], index: 6, kind: input, shape index: {}]
  %s7 = inlined_call_operand.hbm [shape: f32[2,128], index: 7, kind: output, shape index: {}]
  %s8 = sld [smem:[#allocation0]]
  $region62: #{tpu_custom_call.1} parent=0
    _
  %s10 = ssub.s32 1, %s8
  %s11 = scalar_select 0, %s10, %s8
  $region1: #{tpu_custom_call.1} parent=0
    #allocation3 [shape = 'u8[16384]{0}', space=vmem, size = 0x4000, scoped, tag = 'input window, operand 0, single buffered']
    #allocation4 [shape = 's32[1]{0}', space=sflag, size = 0x4, scoped, tag = 'scoped memory for tpu_custom_call.1']
    #allocation5 [shape = 's32[1]{0}', space=sflag, size = 0x4, scoped, tag = 'scoped memory for tpu_custom_call.1']
    #allocation6 [shape = 'u8[131072]{0}', space=vmem, size = 0x20000, scoped, tag = 'input window, operand 1, single buffered']
    #allocation7 [shape = 's32[1]{0}', space=sflag, size = 0x4, scoped, tag = 'scoped memory for tpu_custom_call.1']
    #allocation8 [shape = 'u8[65536]{0}', space=vmem, size = 0x10000, scoped, tag = 'input window, operand 3, single buffered']
    #allocation9 [shape = 'u8[65536]{0}', space=vmem, size = 0x10000, scoped, tag = 'input window, operand 5, single buffered']
    #allocation10 [shape = 's32[1]{0}', space=sflag, size = 0x4, scoped, tag = 'scoped memory for tpu_custom_call.1']
    #allocation11 [shape = 'u8[1024]{0}', space=vmem, size = 0x400, scoped, tag = 'output window, operand 0, single buffered']
    %12 = vsyncpa [#allocation4], 0
    %13 = vsyncpa [#allocation7], 0
    %14 = vsyncpa [#allocation10], 0
    %15 = vsyncpa [#allocation5], 0
    // Predicated region
    $region2: #{tpu_custom_call.1} parent=1 // pred_check
      _
    $region3: #{tpu_custom_call.1} parent=1 // pred_check_branch
      %17 = sbr.rel (0) target = $region5
    $region4: #{tpu_custom_call.1} parent=1 // pred_region
      %s19 = ssub.s32 512, 512
      %20 = vsyncadd [#allocation4], %s19
      %s21 = sshll.u32 [#allocation3], 4
      %s22 = int_to_ptr.vmem [resolvable:$true] %s21
      %27 = dma.hbm_to_vmem [thread:$0]  %s0, 512, %s22, [#allocation4], 256, 256, 16
    $region5: #{tpu_custom_call.1} parent=1 // pred_fallthru
      _
    // Predicated region
    $region6: #{tpu_custom_call.1} parent=1 // pred_check
      _
    $region7: #{tpu_custom_call.1} parent=1 // pred_check_branch
      %29 = sbr.rel (0) target = $region9
    $region8: #{tpu_custom_call.1} parent=1 // pred_region
      %s31 = ssub.s32 4096, 4096
      %32 = vsyncadd [#allocation7], %s31
      %s33 = sshll.u32 [#allocation6], 4
      %s34 = int_to_ptr.vmem [resolvable:$true] %s33
      %39 = dma.hbm_to_vmem [thread:$0]  %s1, 4096, %s34, [#allocation7], 128, 128, 8
    $region9: #{tpu_custom_call.1} parent=1 // pred_fallthru
      _
    // Predicated region
    $region10: #{tpu_custom_call.1} parent=1 // pred_check
      _
    $region11: #{tpu_custom_call.1} parent=1 // pred_check_branch
      %41 = sbr.rel (0) target = $region13
    $region12: #{tpu_custom_call.1} parent=1 // pred_region
      _
    $region13: #{tpu_custom_call.1} parent=1 // pred_fallthru
      _
    // Predicated region
    $region14: #{tpu_custom_call.1} parent=1 // pred_check
      _
    $region15: #{tpu_custom_call.1} parent=1 // pred_check_branch
      %43 = sbr.rel (0) target = $region17
    $region16: #{tpu_custom_call.1} parent=1 // pred_region
      %s45 = ssub.s32 2048, 2048
      %46 = vsyncadd [#allocation7], %s45
      %s47 = sshll.u32 [#allocation8], 4
      %s48 = int_to_ptr.vmem [resolvable:$true] %s47
      %53 = dma.hbm_to_vmem [thread:$0]  %s3, 2048, %s48, [#allocation7], 128, 128, 8
    $region17: #{tpu_custom_call.1} parent=1 // pred_fallthru
      _
    // Predicated region
    $region18: #{tpu_custom_call.1} parent=1 // pred_check
      _
    $region19: #{tpu_custom_call.1} parent=1 // pred_check_branch
      %55 = sbr.rel (0) target = $region21
    $region20: #{tpu_custom_call.1} parent=1 // pred_region
      _
    $region21: #{tpu_custom_call.1} parent=1 // pred_fallthru
      _
    // Predicated region
    $region22: #{tpu_custom_call.1} parent=1 // pred_check
      _
    $region23: #{tpu_custom_call.1} parent=1 // pred_check_branch
      %57 = sbr.rel (0) target = $region25
    $region24: #{tpu_custom_call.1} parent=1 // pred_region
      %s59 = ssub.s32 2048, 2048
      %60 = vsyncadd [#allocation10], %s59
      %s61 = sshll.u32 [#allocation9], 4
      %s62 = int_to_ptr.vmem [resolvable:$true] %s61
      %67 = dma.hbm_to_vmem [thread:$0]  %s5, 2048, %s62, [#allocation10], 128, 128, 8
    $region25: #{tpu_custom_call.1} parent=1 // pred_fallthru
      _
    // Predicated region
    $region26: #{tpu_custom_call.1} parent=1 // pred_check
      _
    $region27: #{tpu_custom_call.1} parent=1 // pred_check_branch
      %69 = sbr.rel (0) target = $region29
    $region28: #{tpu_custom_call.1} parent=1 // pred_region
      _
    $region29: #{tpu_custom_call.1} parent=1 // pred_fallthru
      _
    // Predicated region
    $region30: #{tpu_custom_call.1} parent=1 // pred_check
      _
    $region31: #{tpu_custom_call.1} parent=1 // pred_check_branch
      %71 = sbr.rel (0) target = $region33
    $region32: #{tpu_custom_call.1} parent=1 // pred_region
      %72 = dma.done [#allocation4], 512
    $region33: #{tpu_custom_call.1} parent=1 // pred_fallthru
      _
    // Predicated region
    $region34: #{tpu_custom_call.1} parent=1 // pred_check
      _
    $region35: #{tpu_custom_call.1} parent=1 // pred_check_branch
      %74 = sbr.rel (0) target = $region37
    $region36: #{tpu_custom_call.1} parent=1 // pred_region
      %75 = dma.done [#allocation7], 4096
    $region37: #{tpu_custom_call.1} parent=1 // pred_fallthru
      _
    // Predicated region
    $region38: #{tpu_custom_call.1} parent=1 // pred_check
      _
    $region39: #{tpu_custom_call.1} parent=1 // pred_check_branch
      %77 = sbr.rel (0) target = $region41
    $region40: #{tpu_custom_call.1} parent=1 // pred_region
      %78 = dma.done [#allocation7], 2048
    $region41: #{tpu_custom_call.1} parent=1 // pred_fallthru
      _
    // Predicated region
    $region42: #{tpu_custom_call.1} parent=1 // pred_check
      _
    $region43: #{tpu_custom_call.1} parent=1 // pred_check_branch
      %80 = sbr.rel (0) target = $region45
    $region44: #{tpu_custom_call.1} parent=1 // pred_region
      %81 = dma.done [#allocation10], 2048
    $region45: #{tpu_custom_call.1} parent=1 // pred_fallthru
      _
    %p82 = scmp.eq.s32.totalorder 0, 0
    // Predicated region
    $region46: #{tpu_custom_call.1} parent=1 // pred_check
      %p83 = pneg %p82
    $region47: #{tpu_custom_call.1} parent=1 // pred_check_branch
      %85 = sbr.rel (%p83) target = $region49
    $region48: #{tpu_custom_call.1} parent=1 // pred_region
      %86 = vst [vmem:[#allocation2] sm:$0xf] 0.0
    $region49: #{tpu_custom_call.1} parent=1 // pred_fallthru
      _
    %v87 = vld [vmem:[#allocation2] sm:$0xf]
    %v88 = vld [vmem:[#allocation3] sm:$0xff]
    %v89 = vld [vmem:[#allocation3 + $0x8] sm:$0xff]
    %v90 = vld [vmem:[#allocation3 + $0x10] sm:$0xff]
    %v91 = vld [vmem:[#allocation3 + $0x18] sm:$0xff]
    %v92 = vrot.slane %v88, 4
    %v93 = vadd.f32 %v88, %v92
    %v94 = vrot.slane %v93, 2
    %v95 = vadd.f32 %v93, %v94
    %v96 = vrot.slane %v95, 1
    %v97 = vadd.f32 %v95, %v96
    %v98 = vrot.slane %v89, 4
    %v99 = vadd.f32 %v89, %v98
    %v100 = vrot.slane %v99, 2
    %v101 = vadd.f32 %v99, %v100
    %v102 = vrot.slane %v101, 1
    %v103 = vadd.f32 %v101, %v102
    %v104 = vrot.slane %v90, 4
    %v105 = vadd.f32 %v90, %v104
    %v106 = vrot.slane %v105, 2
    %v107 = vadd.f32 %v105, %v106
    %v108 = vrot.slane %v107, 1
    %v109 = vadd.f32 %v107, %v108
    %v110 = vrot.slane %v91, 4
    %v111 = vadd.f32 %v91, %v110
    %v112 = vrot.slane %v111, 2
    %v113 = vadd.f32 %v111, %v112
    %v114 = vrot.slane %v113, 1
    %v115 = vadd.f32 %v113, %v114
    %v120 = vcombine.low %v97, %v103
    %v122 = vunpack.c.l.s4 1983009808
    %v123 = vunpack.c.0.s8 %v122
    %v124 = vlaneseq
    %v125 = vshrl.u32 %v124, 7
    %v126 = vsub.s32 %v123, %v125
    %v127 = vrot.slane %v120, %v126
    %v128 = vcombine.low %v109, %v115
    %v130 = vunpack.c.l.s4 1983009808
    %v131 = vunpack.c.0.s8 %v130
    %v132 = vlaneseq
    %v133 = vshrl.u32 %v132, 7
    %v134 = vsub.s32 %v131, %v133
    %v135 = vrot.slane %v128, %v134
    %vm136 = vcmask 1044484
    %v137 = vsel %vm136, %v127, %v127
    %vm138 = vcmask 1046534
    %v139 = vsel %vm138, %v127, %v137
    %v140 = vrot.slane %v135, 7
    %vm141 = vcmask 1041409
    %v142 = vsel %vm141, %v140, %v139
    %vm143 = vcmask 1043459
    %v144 = vsel %vm143, %v140, %v142
    %vm145 = vcmask 1045509
    %v146 = vsel %vm145, %v140, %v144
    %vm147 = vcmask 1047559
    %v148 = vsel %vm147, %v140, %v146
    %v150 = vadd.f32 %v87, %v148
    %151 = vst [vmem:[#allocation2] sm:$0xf] %v150
    // Predicated region
    $region50: #{tpu_custom_call.1} parent=1 // pred_check
      %p152 = pneg %p82
    $region51: #{tpu_custom_call.1} parent=1 // pred_check_branch
      %154 = sbr.rel (%p152) target = $region53
    $region52: #{tpu_custom_call.1} parent=1 // pred_region
      %v155 = vld [vmem:[#allocation2] sm:$0xf]
      %v156 = vmul.f32 %v155, 0.125
      %v157 = vld [vmem:[#allocation6] sm:$0xff]
      %v158 = vld [vmem:[#allocation6 + $0x8] sm:$0xff]
      %v159 = vld [vmem:[#allocation6 + $0x10] sm:$0xff]
      %v160 = vld [vmem:[#allocation6 + $0x18] sm:$0xff]
      %v161 = vld [vmem:[#allocation6 + $0x20] sm:$0xff]
      %v162 = vld [vmem:[#allocation6 + $0x28] sm:$0xff]
      %v163 = vld [vmem:[#allocation6 + $0x30] sm:$0xff]
      %v164 = vld [vmem:[#allocation6 + $0x38] sm:$0xff]
      %v165 = vld [vmem:[#allocation6 + $0x40] sm:$0xff]
      %v166 = vld [vmem:[#allocation6 + $0x48] sm:$0xff]
      %v167 = vld [vmem:[#allocation6 + $0x50] sm:$0xff]
      %v168 = vld [vmem:[#allocation6 + $0x58] sm:$0xff]
      %v169 = vld [vmem:[#allocation6 + $0x60] sm:$0xff]
      %v170 = vld [vmem:[#allocation6 + $0x68] sm:$0xff]
      %v171 = vld [vmem:[#allocation6 + $0x70] sm:$0xff]
      %v172 = vld [vmem:[#allocation6 + $0x78] sm:$0xff]
      %v173 = vld [vmem:[#allocation6 + $0x80] sm:$0xff]
      %v174 = vld [vmem:[#allocation6 + $0x88] sm:$0xff]
      %v175 = vld [vmem:[#allocation6 + $0x90] sm:$0xff]
      %v176 = vld [vmem:[#allocation6 + $0x98] sm:$0xff]
      %v177 = vld [vmem:[#allocation6 + $0xa0] sm:$0xff]
      %v178 = vld [vmem:[#allocation6 + $0xa8] sm:$0xff]
      %v179 = vld [vmem:[#allocation6 + $0xb0] sm:$0xff]
      %v180 = vld [vmem:[#allocation6 + $0xb8] sm:$0xff]
      %v181 = vld [vmem:[#allocation6 + $0xc0] sm:$0xff]
      %v182 = vld [vmem:[#allocation6 + $0xc8] sm:$0xff]
      %v183 = vld [vmem:[#allocation6 + $0xd0] sm:$0xff]
      %v184 = vld [vmem:[#allocation6 + $0xd8] sm:$0xff]
      %v185 = vld [vmem:[#allocation6 + $0xe0] sm:$0xff]
      %v186 = vld [vmem:[#allocation6 + $0xe8] sm:$0xff]
      %v187 = vld [vmem:[#allocation6 + $0xf0] sm:$0xff]
      %v188 = vld [vmem:[#allocation6 + $0xf8] sm:$0xff]
      %v189 = vld [vmem:[%s2] sm:$0x1]
      %v191 = vlaneseq
      %v192 = vshrl.u32 %v191, 7
      %v193 = vsub.s32 0, %v192
      %v194 = vrot.slane %v189, %v193
      %v198 = vunpack.c.l.s4 1983009808
      %v199 = vunpack.c.0.s8 %v198
      %v200 = vlaneseq
      %v201 = vshrl.u32 %v200, 7
      %v202 = vsub.s32 %v199, %v201
      %v203 = vrot.slane %v156, %v202
      %v204 = vcombine.high %v203, %v203
      %207 = vmatprep.subr.mxu0 0.0
      %208 = vmatpush1.msra.mxu0 %v157
      %209 = vmatprep.subr.mxu0 0.0
      %210 = vmatpush1.msra.mxu0 %v158
      %211 = vmatprep.subr.mxu0 0.0
      %212 = vmatpush1.msra.mxu0 %v159
      %213 = vmatprep.subr.mxu0 0.0
      %214 = vmatpush1.msra.mxu0 %v160
      %215 = vmatprep.subr.mxu0 0.0
      %216 = vmatpush1.msra.mxu0 %v161
      %217 = vmatprep.subr.mxu0 0.0
      %218 = vmatpush1.msra.mxu0 %v162
      %219 = vmatprep.subr.mxu0 0.0
      %220 = vmatpush1.msra.mxu0 %v163
      %221 = vmatprep.subr.mxu0 0.0
      %222 = vmatpush1.msra.mxu0 %v164
      %223 = vmatprep.subr.mxu0 0.0
      %224 = vmatpush1.msra.mxu0 %v165
      %225 = vmatprep.subr.mxu0 0.0
      %226 = vmatpush1.msra.mxu0 %v166
      %227 = vmatprep.subr.mxu0 0.0
      %228 = vmatpush1.msra.mxu0 %v167
      %229 = vmatprep.subr.mxu0 0.0
      %230 = vmatpush1.msra.mxu0 %v168
      %231 = vmatprep.subr.mxu0 0.0
      %232 = vmatpush1.msra.mxu0 %v169
      %233 = vmatprep.subr.mxu0 0.0
      %234 = vmatpush1.msra.mxu0 %v170
      %235 = vmatprep.subr.mxu0 0.0
      %236 = vmatpush1.msra.mxu0 %v171
      %237 = vmatprep.subr.mxu0 0.0
      %238 = vmatpush1.msra.mxu0 %v172
      %239 = vmatprep.subr.mxu0 0.0
      %240 = vmatpush1.msra.mxu0 %v173
      %241 = vmatprep.subr.mxu0 0.0
      %242 = vmatpush1.msra.mxu0 %v174
      %243 = vmatprep.subr.mxu0 0.0
      %244 = vmatpush1.msra.mxu0 %v175
      %245 = vmatprep.subr.mxu0 0.0
      %246 = vmatpush1.msra.mxu0 %v176
      %247 = vmatprep.subr.mxu0 0.0
      %248 = vmatpush1.msra.mxu0 %v177
      %249 = vmatprep.subr.mxu0 0.0
      %250 = vmatpush1.msra.mxu0 %v178
      %251 = vmatprep.subr.mxu0 0.0
      %252 = vmatpush1.msra.mxu0 %v179
      %253 = vmatprep.subr.mxu0 0.0
      %254 = vmatpush1.msra.mxu0 %v180
      %255 = vmatprep.subr.mxu0 0.0
      %256 = vmatpush1.msra.mxu0 %v181
      %257 = vmatprep.subr.mxu0 0.0
      %258 = vmatpush1.msra.mxu0 %v182
      %259 = vmatprep.subr.mxu0 0.0
      %260 = vmatpush1.msra.mxu0 %v183
      %261 = vmatprep.subr.mxu0 0.0
      %262 = vmatpush1.msra.mxu0 %v184
      %263 = vmatprep.subr.mxu0 0.0
      %264 = vmatpush1.msra.mxu0 %v185
      %265 = vmatprep.subr.mxu0 0.0
      %266 = vmatpush1.msra.mxu0 %v186
      %267 = vmatprep.subr.mxu0 0.0
      %268 = vmatpush1.msra.mxu0 %v187
      %269 = vmatprep.subr.mxu0 0.0
      %270 = vmatpush1.msra.mxu0 %v188
      %271 = vmatprep.mubr.f32.mxu0 %v204
      %272 = vmatmul.mubr.f32.gmra.mrb[0].mxu0 %v203
      %v273 = vpop.f32.mrb[0].mxu0
      %v274 = vadd.f32 %v194, %v273
      %v275 = vpop.f32.mrb[0].mxu0
      %276 = vdwg.mxu0
      %v277 = vmax.f32 %v274, 0.0
      %v278 = vld [vmem:[#allocation8] sm:$0xff]
      %v279 = vld [vmem:[#allocation8 + $0x8] sm:$0xff]
      %v280 = vld [vmem:[#allocation8 + $0x10] sm:$0xff]
      %v281 = vld [vmem:[#allocation8 + $0x18] sm:$0xff]
      %v282 = vld [vmem:[#allocation8 + $0x20] sm:$0xff]
      %v283 = vld [vmem:[#allocation8 + $0x28] sm:$0xff]
      %v284 = vld [vmem:[#allocation8 + $0x30] sm:$0xff]
      %v285 = vld [vmem:[#allocation8 + $0x38] sm:$0xff]
      %v286 = vld [vmem:[#allocation8 + $0x40] sm:$0xff]
      %v287 = vld [vmem:[#allocation8 + $0x48] sm:$0xff]
      %v288 = vld [vmem:[#allocation8 + $0x50] sm:$0xff]
      %v289 = vld [vmem:[#allocation8 + $0x58] sm:$0xff]
      %v290 = vld [vmem:[#allocation8 + $0x60] sm:$0xff]
      %v291 = vld [vmem:[#allocation8 + $0x68] sm:$0xff]
      %v292 = vld [vmem:[#allocation8 + $0x70] sm:$0xff]
      %v293 = vld [vmem:[#allocation8 + $0x78] sm:$0xff]
      %v294 = vld [vmem:[%s4] sm:$0x1]
      %v296 = vlaneseq
      %v297 = vshrl.u32 %v296, 7
      %v298 = vsub.s32 0, %v297
      %v299 = vrot.slane %v294, %v298
      %301 = vmatprep.subr.mxu0 0.0
      %302 = vmatpush1.msra.mxu0 %v278
      %303 = vmatprep.subr.mxu0 0.0
      %304 = vmatpush1.msra.mxu0 %v279
      %305 = vmatprep.subr.mxu0 0.0
      %306 = vmatpush1.msra.mxu0 %v280
      %307 = vmatprep.subr.mxu0 0.0
      %308 = vmatpush1.msra.mxu0 %v281
      %309 = vmatprep.subr.mxu0 0.0
      %310 = vmatpush1.msra.mxu0 %v282
      %311 = vmatprep.subr.mxu0 0.0
      %312 = vmatpush1.msra.mxu0 %v283
      %313 = vmatprep.subr.mxu0 0.0
      %314 = vmatpush1.msra.mxu0 %v284
      %315 = vmatprep.subr.mxu0 0.0
      %316 = vmatpush1.msra.mxu0 %v285
      %317 = vmatprep.subr.mxu0 0.0
      %318 = vmatpush1.msra.mxu0 %v286
      %319 = vmatprep.subr.mxu0 0.0
      %320 = vmatpush1.msra.mxu0 %v287
      %321 = vmatprep.subr.mxu0 0.0
      %322 = vmatpush1.msra.mxu0 %v288
      %323 = vmatprep.subr.mxu0 0.0
      %324 = vmatpush1.msra.mxu0 %v289
      %325 = vmatprep.subr.mxu0 0.0
      %326 = vmatpush1.msra.mxu0 %v290
      %327 = vmatprep.subr.mxu0 0.0
      %328 = vmatpush1.msra.mxu0 %v291
      %329 = vmatprep.subr.mxu0 0.0
      %330 = vmatpush1.msra.mxu0 %v292
      %331 = vmatprep.subr.mxu0 0.0
      %332 = vmatpush1.msra.mxu0 %v293
      %333 = vmatprep.subr.mxu0 0.0
      %334 = vmatpush1.msra.mxu0 0.0
      %335 = vmatprep.subr.mxu0 0.0
      %336 = vmatpush1.msra.mxu0 0.0
      %337 = vmatprep.subr.mxu0 0.0
      %338 = vmatpush1.msra.mxu0 0.0
      %339 = vmatprep.subr.mxu0 0.0
      %340 = vmatpush1.msra.mxu0 0.0
      %341 = vmatprep.subr.mxu0 0.0
      %342 = vmatpush1.msra.mxu0 0.0
      %343 = vmatprep.subr.mxu0 0.0
      %344 = vmatpush1.msra.mxu0 0.0
      %345 = vmatprep.subr.mxu0 0.0
      %346 = vmatpush1.msra.mxu0 0.0
      %347 = vmatprep.subr.mxu0 0.0
      %348 = vmatpush1.msra.mxu0 0.0
      %349 = vmatprep.subr.mxu0 0.0
      %350 = vmatpush1.msra.mxu0 0.0
      %351 = vmatprep.subr.mxu0 0.0
      %352 = vmatpush1.msra.mxu0 0.0
      %353 = vmatprep.subr.mxu0 0.0
      %354 = vmatpush1.msra.mxu0 0.0
      %355 = vmatprep.subr.mxu0 0.0
      %356 = vmatpush1.msra.mxu0 0.0
      %357 = vmatprep.subr.mxu0 0.0
      %358 = vmatpush1.msra.mxu0 0.0
      %359 = vmatprep.subr.mxu0 0.0
      %360 = vmatpush1.msra.mxu0 0.0
      %361 = vmatprep.subr.mxu0 0.0
      %362 = vmatpush1.msra.mxu0 0.0
      %363 = vmatprep.subr.mxu0 0.0
      %364 = vmatpush1.msra.mxu0 0.0
      %365 = vmatprep.mubr.f32.mxu0 0.0
      %366 = vmatmul.mubr.f32.gmra.mrb[0].mxu0 %v277
      %v367 = vpop.f32.mrb[0].mxu0
      %v368 = vadd.f32 %v299, %v367
      %v369 = vpop.f32.mrb[0].mxu0
      %370 = vdwg.mxu0
      %v371 = vmax.f32 %v368, 0.0
      %v372 = vld [vmem:[#allocation9] sm:$0xff]
      %v373 = vld [vmem:[#allocation9 + $0x8] sm:$0xff]
      %v374 = vld [vmem:[#allocation9 + $0x10] sm:$0xff]
      %v375 = vld [vmem:[#allocation9 + $0x18] sm:$0xff]
      %v376 = vld [vmem:[#allocation9 + $0x20] sm:$0xff]
      %v377 = vld [vmem:[#allocation9 + $0x28] sm:$0xff]
      %v378 = vld [vmem:[#allocation9 + $0x30] sm:$0xff]
      %v379 = vld [vmem:[#allocation9 + $0x38] sm:$0xff]
      %v380 = vld [vmem:[#allocation9 + $0x40] sm:$0xff]
      %v381 = vld [vmem:[#allocation9 + $0x48] sm:$0xff]
      %v382 = vld [vmem:[#allocation9 + $0x50] sm:$0xff]
      %v383 = vld [vmem:[#allocation9 + $0x58] sm:$0xff]
      %v384 = vld [vmem:[#allocation9 + $0x60] sm:$0xff]
      %v385 = vld [vmem:[#allocation9 + $0x68] sm:$0xff]
      %v386 = vld [vmem:[#allocation9 + $0x70] sm:$0xff]
      %v387 = vld [vmem:[#allocation9 + $0x78] sm:$0xff]
      %v388 = vld [vmem:[%s6] sm:$0x1]
      %v390 = vlaneseq
      %v391 = vshrl.u32 %v390, 7
      %v392 = vsub.s32 0, %v391
      %v393 = vrot.slane %v388, %v392
      %395 = vmatprep.subr.mxu0 0.0
      %396 = vmatpush1.msra.mxu0 %v372
      %397 = vmatprep.subr.mxu0 0.0
      %398 = vmatpush1.msra.mxu0 %v373
      %399 = vmatprep.subr.mxu0 0.0
      %400 = vmatpush1.msra.mxu0 %v374
      %401 = vmatprep.subr.mxu0 0.0
      %402 = vmatpush1.msra.mxu0 %v375
      %403 = vmatprep.subr.mxu0 0.0
      %404 = vmatpush1.msra.mxu0 %v376
      %405 = vmatprep.subr.mxu0 0.0
      %406 = vmatpush1.msra.mxu0 %v377
      %407 = vmatprep.subr.mxu0 0.0
      %408 = vmatpush1.msra.mxu0 %v378
      %409 = vmatprep.subr.mxu0 0.0
      %410 = vmatpush1.msra.mxu0 %v379
      %411 = vmatprep.subr.mxu0 0.0
      %412 = vmatpush1.msra.mxu0 %v380
      %413 = vmatprep.subr.mxu0 0.0
      %414 = vmatpush1.msra.mxu0 %v381
      %415 = vmatprep.subr.mxu0 0.0
      %416 = vmatpush1.msra.mxu0 %v382
      %417 = vmatprep.subr.mxu0 0.0
      %418 = vmatpush1.msra.mxu0 %v383
      %419 = vmatprep.subr.mxu0 0.0
      %420 = vmatpush1.msra.mxu0 %v384
      %421 = vmatprep.subr.mxu0 0.0
      %422 = vmatpush1.msra.mxu0 %v385
      %423 = vmatprep.subr.mxu0 0.0
      %424 = vmatpush1.msra.mxu0 %v386
      %425 = vmatprep.subr.mxu0 0.0
      %426 = vmatpush1.msra.mxu0 %v387
      %427 = vmatprep.subr.mxu0 0.0
      %428 = vmatpush1.msra.mxu0 0.0
      %429 = vmatprep.subr.mxu0 0.0
      %430 = vmatpush1.msra.mxu0 0.0
      %431 = vmatprep.subr.mxu0 0.0
      %432 = vmatpush1.msra.mxu0 0.0
      %433 = vmatprep.subr.mxu0 0.0
      %434 = vmatpush1.msra.mxu0 0.0
      %435 = vmatprep.subr.mxu0 0.0
      %436 = vmatpush1.msra.mxu0 0.0
      %437 = vmatprep.subr.mxu0 0.0
      %438 = vmatpush1.msra.mxu0 0.0
      %439 = vmatprep.subr.mxu0 0.0
      %440 = vmatpush1.msra.mxu0 0.0
      %441 = vmatprep.subr.mxu0 0.0
      %442 = vmatpush1.msra.mxu0 0.0
      %443 = vmatprep.subr.mxu0 0.0
      %444 = vmatpush1.msra.mxu0 0.0
      %445 = vmatprep.subr.mxu0 0.0
      %446 = vmatpush1.msra.mxu0 0.0
      %447 = vmatprep.subr.mxu0 0.0
      %448 = vmatpush1.msra.mxu0 0.0
      %449 = vmatprep.subr.mxu0 0.0
      %450 = vmatpush1.msra.mxu0 0.0
      %451 = vmatprep.subr.mxu0 0.0
      %452 = vmatpush1.msra.mxu0 0.0
      %453 = vmatprep.subr.mxu0 0.0
      %454 = vmatpush1.msra.mxu0 0.0
      %455 = vmatprep.subr.mxu0 0.0
      %456 = vmatpush1.msra.mxu0 0.0
      %457 = vmatprep.subr.mxu0 0.0
      %458 = vmatpush1.msra.mxu0 0.0
      %459 = vmatprep.mubr.f32.mxu0 0.0
      %460 = vmatmul.mubr.f32.gmra.mrb[0].mxu0 %v371
      %v461 = vpop.f32.mrb[0].mxu0
      %v462 = vadd.f32 %v393, %v461
      %v463 = vpop.f32.mrb[0].mxu0
      %464 = vdwg.mxu0
      %465 = vst [vmem:[#allocation11] sm:$0x3] %v462
    $region53: #{tpu_custom_call.1} parent=1 // pred_fallthru
      _
    // Predicated region
    $region54: #{tpu_custom_call.1} parent=1 // pred_check
      _
    $region55: #{tpu_custom_call.1} parent=1 // pred_check_branch
      %467 = sbr.rel (0) target = $region57
    $region56: #{tpu_custom_call.1} parent=1 // pred_region
      %s469 = ssub.s32 32, 32
      %470 = vsyncadd [#allocation5], %s469
      %s472 = sshll.u32 [#allocation11], 4
      %s473 = int_to_ptr.vmem [resolvable:$true] %s472
      %475 = dma.vmem_to_hbm [thread:$0]  %s473, 32, %s7, [#allocation5]
    $region57: #{tpu_custom_call.1} parent=1 // pred_fallthru
      _
    // Predicated region
    $region58: #{tpu_custom_call.1} parent=1 // pred_check
      _
    $region59: #{tpu_custom_call.1} parent=1 // pred_check_branch
      %477 = sbr.rel (0) target = $region61
    $region60: #{tpu_custom_call.1} parent=1 // pred_region
      %478 = dma.done [#allocation5], 32
    $region61: #{tpu_custom_call.1} parent=1 // pred_fallthru
      _
    %479 = vsyncpa [#allocation4], 1
    %480 = vsyncpa [#allocation7], 1
    %481 = vsyncpa [#allocation10], 1
    %482 = vsyncpa [#allocation5], 1

</llo_original>
